<compile_context>
chip_gen: v7x
topology: tpu7x:2x2x1
jax: 0.10.0
libtpu: 0.0.40
codegen_flags: <defaults>
</compile_context>

<pallas_src>
import jax
import jax.numpy as jnp
from jax.experimental import pallas as pl
from jax.experimental.pallas import tpu as pltpu


def mlp_kernel(x_ref, w1_ref, b1_ref, w2_ref, b2_ref, o_ref):
    # fc1 on the MXU: [tm, D_in] @ [D_in, H] -> [tm, H], f32 accumulation.
    h = jnp.dot(x_ref[...], w1_ref[...], preferred_element_type=jnp.float32)
    h = jnp.maximum(h + b1_ref[...], 0.0)                     # bias + ReLU (VPU)

    # fc2 (output_dim == 1), computed directly lane-major: contract H of the
    # w2 row [1, H] with H of h [tm, H] (trans-B contraction) -> y [1, tm].
    # This avoids both a 1-lane-wide MXU result and any sublane->lane relayout.
    y = jax.lax.dot_general(
        w2_ref[...], h, (((1,), (1,)), ((), ())),
        preferred_element_type=jnp.float32)
    y = y + b2_ref[...]                                       # (1,1) -> (1,tm) broadcast

    # Lane-dense store: one tm-wide row of the (1, B_pad) output per step.
    o_ref[...] = y.astype(o_ref.dtype)


def _round_up(a, m):
    return (a + m - 1) // m * m


def _pick_tm(batch):
    """Rows of x processed per grid step."""
    if batch <= 512:
        # One step covering the whole batch (padding <= 7 rows).  tm equals the
        # padded batch, so the (1, tm) output block equals the full array dim.
        return _round_up(batch, 8)
    # Multi-step path: tm must be a multiple of 128 so every (1, tm) output
    # block is lane-aligned.  Cap at 1024 rows/step and at ceil(B/2) so there
    # are always >= 2 steps (lets the "parallel" axis shard across v7x's two
    # TensorCores); among candidates keep the largest with <= ~12.5% padding.
    cap = min(1024, _round_up((batch + 1) // 2, 128))
    best = 128
    for tm in range(128, cap + 1, 128):
        pad = _round_up(batch, tm) - batch
        if pad * 8 <= batch:
            best = tm
    return best


def mlp_forward(x, w1, b1, w2, b2):
    """x: [B, D_in]; w1: [D_in, H]; b1: [H]; w2: [H, 1]; b2: [1] -> [B, 1]."""
    B, D_in = x.shape
    H = w1.shape[1]
    D_out = w2.shape[1]
    assert D_out == 1, "kernel is specialized for the module's output_dim=1"

    tm = _pick_tm(B)
    B_pad = _round_up(B, tm)
    if B_pad != B:
        x = jnp.pad(x, ((0, B_pad - B), (0, 0)))
    grid = (B_pad // tm,)

    b1_2d = b1.reshape(1, H)
    w2_row = w2.reshape(1, H)      # [H, 1] column -> [1, H] row (same data order)
    b2_2d = b2.reshape(1, 1)       # tiny; stays resident in VMEM

    out_row = pl.pallas_call(
        mlp_kernel,
        out_shape=jax.ShapeDtypeStruct((1, B_pad), x.dtype),
        grid_spec=pltpu.PrefetchScalarGridSpec(
            num_scalar_prefetch=0,
            grid=grid,
            in_specs=[
                pl.BlockSpec((tm, D_in), lambda i: (i, 0)),   # x: tiled over batch
                pl.BlockSpec((D_in, H), lambda i: (0, 0)),    # w1: resident
                pl.BlockSpec((1, H), lambda i: (0, 0)),       # b1: resident
                pl.BlockSpec((1, H), lambda i: (0, 0)),       # w2 row: resident
                pl.BlockSpec((1, 1), lambda i: (0, 0)),       # b2: resident
            ],
            out_specs=pl.BlockSpec((1, tm), lambda i: (0, i)),  # lane-dense row
        ),
        compiler_params=pltpu.CompilerParams(
            dimension_semantics=("parallel",),      # 2-TC sharding on v7x
            vmem_limit_bytes=32 * 1024 * 1024,      # safe on v5e/v6e/v7x
        ),
    )(x, w1, b1_2d, w2_row, b2_2d)

    # (1, B_pad) row -> [B, 1] column, dropping batch padding.
    return out_row[0, :B].reshape(B, 1)


def _reference(x, w1_pt, b1_pt, w2_pt, b2_pt):
    # Pure-JAX reference matching the PyTorch forward semantics.
    return jnp.maximum(x @ w1_pt.T + b1_pt, 0.0) @ w2_pt.T + b2_pt


if __name__ == "__main__":
    # Shapes implied by the module: hidden_dim=64, output_dim=1; small demo batch.
    batch, input_dim, hidden_dim, output_dim = 8, 16, 64, 1

    key = jax.random.PRNGKey(0)
    kx, kw1, kb1, kw2, kb2, kx2 = jax.random.split(key, 6)

    x = jax.random.normal(kx, (batch, input_dim), dtype=jnp.float32)

    # PyTorch nn.Linear layout: weight [out, in], bias [out].
    w1_pt = jax.random.normal(kw1, (hidden_dim, input_dim), dtype=jnp.float32) * 0.1
    b1_pt = jax.random.normal(kb1, (hidden_dim,), dtype=jnp.float32) * 0.1
    w2_pt = jax.random.normal(kw2, (output_dim, hidden_dim), dtype=jnp.float32) * 0.1
    b2_pt = jax.random.normal(kb2, (output_dim,), dtype=jnp.float32) * 0.1

    # Kernel takes transposed ([in, out]) weights so it computes plain x @ w + b.
    out = mlp_forward(x, w1_pt.T, b1_pt, w2_pt.T, b2_pt)
    out = jax.block_until_ready(out)
    ref = _reference(x, w1_pt, b1_pt, w2_pt, b2_pt)
    assert out.shape == (batch, output_dim)
    assert jnp.allclose(out, ref, atol=1e-5, rtol=1e-5), "mismatch vs reference"

    # Also exercise the multi-tile path (batch padding + >=2 lane-aligned
    # output blocks + "parallel" grid axis).
    batch2 = 600
    x2 = jax.random.normal(kx2, (batch2, input_dim), dtype=jnp.float32)
    out2 = jax.block_until_ready(mlp_forward(x2, w1_pt.T, b1_pt, w2_pt.T, b2_pt))
    ref2 = _reference(x2, w1_pt, b1_pt, w2_pt, b2_pt)
    assert out2.shape == (batch2, output_dim)
    assert jnp.allclose(out2, ref2, atol=1e-5, rtol=1e-5), "mismatch vs reference (tiled)"

    print("KERNEL_OK")
</pallas_src>

<mosaic_0001>
module attributes {stable_mosaic.version = 11 : i64} {
  func.func @mlp_kernel(%arg0: i32, %arg1: memref<8x16xf32, #tpu.memory_space<vmem>>, %arg2: memref<16x64xf32, #tpu.memory_space<vmem>>, %arg3: memref<1x64xf32, #tpu.memory_space<vmem>>, %arg4: memref<1x64xf32, #tpu.memory_space<vmem>>, %arg5: memref<1x1xf32, #tpu.memory_space<vmem>>, %arg6: memref<1x8xf32, #tpu.memory_space<vmem>>) attributes {dimension_semantics = [#tpu.dimension_semantics<parallel>], iteration_bounds = array<i64: 1>, scalar_prefetch = 0 : i64, scratch_operands = 0 : i64, tpu.core_type = #tpu.core_type<tc>, window_params = [{transform_indices = @transform_0, window_bounds = array<i64: 8, 16>}, {pipeline_mode = #tpu.pipeline_mode<synchronous>, transform_indices = @transform_1, window_bounds = array<i64: 16, 64>}, {pipeline_mode = #tpu.pipeline_mode<synchronous>, transform_indices = @transform_2, window_bounds = array<i64: 1, 64>}, {pipeline_mode = #tpu.pipeline_mode<synchronous>, transform_indices = @transform_3, window_bounds = array<i64: 1, 64>}, {pipeline_mode = #tpu.pipeline_mode<synchronous>, transform_indices = @transform_4, window_bounds = array<i64: 1, 1>}, {transform_indices = @transform_5, window_bounds = array<i64: 1, 8>}]} {
    %c0 = arith.constant 0 : index
    %c0_0 = arith.constant 0 : index
    %0 = vector.load %arg1[%c0, %c0_0] : memref<8x16xf32, #tpu.memory_space<vmem>>, vector<8x16xf32>
    %c0_1 = arith.constant 0 : index
    %c0_2 = arith.constant 0 : index
    %1 = vector.load %arg2[%c0_1, %c0_2] : memref<16x64xf32, #tpu.memory_space<vmem>>, vector<16x64xf32>
    %cst = arith.constant dense<0.000000e+00> : vector<8x64xf32>
    %2 = tpu.matmul %0, %1, %cst {dimension_numbers = #tpu.dot_dimension_numbers<[1], [0], [0], [1], [0, 0, 1, 1], [], []>} : vector<8x16xf32>, vector<16x64xf32>, vector<8x64xf32> -> vector<8x64xf32>
    %c0_3 = arith.constant 0 : index
    %c0_4 = arith.constant 0 : index
    %3 = vector.load %arg3[%c0_3, %c0_4] : memref<1x64xf32, #tpu.memory_space<vmem>>, vector<1x64xf32>
    %4 = vector.broadcast %3 : vector<1x64xf32> to vector<8x64xf32>
    %5 = arith.addf %2, %4 : vector<8x64xf32>
    %cst_5 = arith.constant 0.000000e+00 : f32
    %6 = vector.broadcast %cst_5 : f32 to vector<8x64xf32>
    %7 = arith.maximumf %5, %6 : vector<8x64xf32>
    %c0_6 = arith.constant 0 : index
    %c0_7 = arith.constant 0 : index
    %8 = vector.load %arg4[%c0_6, %c0_7] : memref<1x64xf32, #tpu.memory_space<vmem>>, vector<1x64xf32>
    %cst_8 = arith.constant dense<0.000000e+00> : vector<1x8xf32>
    %9 = tpu.matmul %8, %7, %cst_8 {dimension_numbers = #tpu.dot_dimension_numbers<[1], [1], [0], [0], [0, 0, 1, 0], [], []>} : vector<1x64xf32>, vector<8x64xf32>, vector<1x8xf32> -> vector<1x8xf32>
    %c0_9 = arith.constant 0 : index
    %c0_10 = arith.constant 0 : index
    %10 = vector.load %arg5[%c0_9, %c0_10] : memref<1x1xf32, #tpu.memory_space<vmem>>, vector<1x1xf32>
    %11 = vector.broadcast %10 : vector<1x1xf32> to vector<1x8xf32>
    %12 = arith.addf %9, %11 : vector<1x8xf32>
    %c0_11 = arith.constant 0 : index
    %c0_12 = arith.constant 0 : index
    %13 = vector.load %arg6[%c0_11, %c0_12] : memref<1x8xf32, #tpu.memory_space<vmem>>, vector<1x8xf32>
    tpu.vector_store %arg6[%c0_11, %c0_12], %12 {strides = array<i32>} : memref<1x8xf32, #tpu.memory_space<vmem>>, vector<1x8xf32>,
    return
  }
  func.func @transform_0(%arg0: i32) -> (i32, i32) {
    %c0_i32 = arith.constant 0 : i32
    %c0_i32_0 = arith.constant 0 : i32
    return %arg0, %c0_i32 : i32, i32
  }
  func.func @transform_1(%arg0: i32) -> (i32, i32) {
    %c0_i32 = arith.constant 0 : i32
    %c0_i32_0 = arith.constant 0 : i32
    %c0_i32_1 = arith.constant 0 : i32
    return %c0_i32, %c0_i32_0 : i32, i32
  }
  func.func @transform_2(%arg0: i32) -> (i32, i32) {
    %c0_i32 = arith.constant 0 : i32
    %c0_i32_0 = arith.constant 0 : i32
    %c0_i32_1 = arith.constant 0 : i32
    return %c0_i32, %c0_i32_0 : i32, i32
  }
  func.func @transform_3(%arg0: i32) -> (i32, i32) {
    %c0_i32 = arith.constant 0 : i32
    %c0_i32_0 = arith.constant 0 : i32
    %c0_i32_1 = arith.constant 0 : i32
    return %c0_i32, %c0_i32_0 : i32, i32
  }
  func.func @transform_4(%arg0: i32) -> (i32, i32) {
    %c0_i32 = arith.constant 0 : i32
    %c0_i32_0 = arith.constant 0 : i32
    %c0_i32_1 = arith.constant 0 : i32
    return %c0_i32, %c0_i32_0 : i32, i32
  }
  func.func @transform_5(%arg0: i32) -> (i32, i32) {
    %c0_i32 = arith.constant 0 : i32
    %c0_i32_0 = arith.constant 0 : i32
    return %c0_i32, %arg0 : i32, i32
  }
}

</mosaic_0001>

<llo_original>
// kernel: tpu_custom_call.1
$region0: #{tpu_custom_call.1}
  #allocation0 [shape = 'u32[]', space=smem, size = 0x4, offset = 0x4, fixed_abs, tag = 'smem constant byte address 0x4 - core index']
  #allocation1 [shape = 'u32[144,128]{1,0:T(1,128)}', space=vmem, size = 0x12000, scoped, tag = 'internal scratch']
  #allocation2 [shape = 'f32[1,1]{1,0:T(1,128)S(1)}', space=vmem, size = 0x200, scoped, tag = 'scoped memory for tpu_custom_call.1']
  %s0 = inlined_call_operand.hbm [shape: f32[8,16], index: 0, kind: input, shape index: {}]
  %s1 = inlined_call_operand.hbm [shape: f32[16,64], index: 1, kind: input, shape index: {}]
  %s2 = inlined_call_operand.vmem [shape: f32[1,64], index: 2, kind: input, shape index: {}]
  %s3 = inlined_call_operand.vmem [shape: f32[1,64], index: 3, kind: input, shape index: {}]
  %s4 = inlined_call_operand.<no memory space> [shape: f32[1,1], index: 4, kind: input, shape index: {}]
  %s5 = inlined_call_operand.hbm [shape: f32[1,8], index: 5, kind: output, shape index: {}]
  %s6 = sld [smem:[#allocation0]]
  $region38: #{tpu_custom_call.1} parent=0
    _
  %s8 = ssub.s32 1, %s6
  %s9 = scalar_select 0, %s8, %s6
  %v10 = vstv %s4
  %11 = vst [vmem:[#allocation2] sm:$0x1] %v10
  $region1: #{tpu_custom_call.1} parent=0
    #allocation3 [shape = 'u8[4096]{0}', space=vmem, size = 0x1000, scoped, tag = 'input window, operand 0, single buffered']
    #allocation4 [shape = 's32[1]{0}', space=sflag, size = 0x4, scoped, tag = 'scoped memory for tpu_custom_call.1']
    #allocation5 [shape = 's32[1]{0}', space=sflag, size = 0x4, scoped, tag = 'scoped memory for tpu_custom_call.1']
    #allocation6 [shape = 'u8[8192]{0}', space=vmem, size = 0x2000, scoped, tag = 'input window, operand 1, single buffered']
    #allocation7 [shape = 's32[1]{0}', space=sflag, size = 0x4, scoped, tag = 'scoped memory for tpu_custom_call.1']
    #allocation8 [shape = 'u8[512]{0}', space=vmem, size = 0x400, scoped, tag = 'output window, operand 0, single buffered']
    %12 = vsyncpa [#allocation4], 0
    %13 = vsyncpa [#allocation7], 0
    %14 = vsyncpa [#allocation5], 0
    // Predicated region
    $region2: #{tpu_custom_call.1} parent=1 // pred_check
      _
    $region3: #{tpu_custom_call.1} parent=1 // pred_check_branch
      %16 = sbr.rel (0) target = $region5
    $region4: #{tpu_custom_call.1} parent=1 // pred_region
      %s18 = ssub.s32 128, 128
      %19 = vsyncadd [#allocation4], %s18
      %s21 = sshll.u32 [#allocation3], 4
      %s22 = int_to_ptr.vmem [resolvable:$true] %s21
      %24 = dma.hbm_to_vmem [thread:$0]  %s0, 128, %s22, [#allocation4]
    $region5: #{tpu_custom_call.1} parent=1 // pred_fallthru
      _
    // Predicated region
    $region6: #{tpu_custom_call.1} parent=1 // pred_check
      _
    $region7: #{tpu_custom_call.1} parent=1 // pred_check_branch
      %26 = sbr.rel (0) target = $region9
    $region8: #{tpu_custom_call.1} parent=1 // pred_region
      %s28 = ssub.s32 256, 256
      %29 = vsyncadd [#allocation7], %s28
      %s30 = sshll.u32 [#allocation6], 4
      %s31 = int_to_ptr.vmem [resolvable:$true] %s30
      %36 = dma.hbm_to_vmem [thread:$0]  %s1, 256, %s31, [#allocation7], 128, 128, 8
    $region9: #{tpu_custom_call.1} parent=1 // pred_fallthru
      _
    // Predicated region
    $region10: #{tpu_custom_call.1} parent=1 // pred_check
      _
    $region11: #{tpu_custom_call.1} parent=1 // pred_check_branch
      %38 = sbr.rel (0) target = $region13
    $region12: #{tpu_custom_call.1} parent=1 // pred_region
      _
    $region13: #{tpu_custom_call.1} parent=1 // pred_fallthru
      _
    // Predicated region
    $region14: #{tpu_custom_call.1} parent=1 // pred_check
      _
    $region15: #{tpu_custom_call.1} parent=1 // pred_check_branch
      %40 = sbr.rel (0) target = $region17
    $region16: #{tpu_custom_call.1} parent=1 // pred_region
      _
    $region17: #{tpu_custom_call.1} parent=1 // pred_fallthru
      _
    // Predicated region
    $region18: #{tpu_custom_call.1} parent=1 // pred_check
      _
    $region19: #{tpu_custom_call.1} parent=1 // pred_check_branch
      %42 = sbr.rel (0) target = $region21
    $region20: #{tpu_custom_call.1} parent=1 // pred_region
      _
    $region21: #{tpu_custom_call.1} parent=1 // pred_fallthru
      _
    // Predicated region
    $region22: #{tpu_custom_call.1} parent=1 // pred_check
      _
    $region23: #{tpu_custom_call.1} parent=1 // pred_check_branch
      %44 = sbr.rel (0) target = $region25
    $region24: #{tpu_custom_call.1} parent=1 // pred_region
      %45 = dma.done [#allocation4], 128
    $region25: #{tpu_custom_call.1} parent=1 // pred_fallthru
      _
    // Predicated region
    $region26: #{tpu_custom_call.1} parent=1 // pred_check
      _
    $region27: #{tpu_custom_call.1} parent=1 // pred_check_branch
      %47 = sbr.rel (0) target = $region29
    $region28: #{tpu_custom_call.1} parent=1 // pred_region
      %48 = dma.done [#allocation7], 256
    $region29: #{tpu_custom_call.1} parent=1 // pred_fallthru
      _
    %v49 = vld [vmem:[#allocation3] sm:$0xff]
    %v50 = vld [vmem:[#allocation6] sm:$0xff]
    %v51 = vld [vmem:[#allocation6 + $0x8] sm:$0xff]
    %v52 = vld [vmem:[%s2] sm:$0x1]
    %v54 = vlaneseq
    %v55 = vshrl.u32 %v54, 7
    %v56 = vsub.s32 0, %v55
    %v57 = vrot.slane %v52, %v56
    %vm59 = vcmask 130048
    %v61 = vsel %vm59, %v49, 0
    %63 = vmatprep.subr.mxu0 0.0
    %64 = vmatpush1.msra.mxu0 %v50
    %65 = vmatprep.subr.mxu0 0.0
    %66 = vmatpush1.msra.mxu0 %v51
    %67 = vmatprep.subr.mxu0 0.0
    %68 = vmatpush1.msra.mxu0 0.0
    %69 = vmatprep.subr.mxu0 0.0
    %70 = vmatpush1.msra.mxu0 0.0
    %71 = vmatprep.subr.mxu0 0.0
    %72 = vmatpush1.msra.mxu0 0.0
    %73 = vmatprep.subr.mxu0 0.0
    %74 = vmatpush1.msra.mxu0 0.0
    %75 = vmatprep.subr.mxu0 0.0
    %76 = vmatpush1.msra.mxu0 0.0
    %77 = vmatprep.subr.mxu0 0.0
    %78 = vmatpush1.msra.mxu0 0.0
    %79 = vmatprep.subr.mxu0 0.0
    %80 = vmatpush1.msra.mxu0 0.0
    %81 = vmatprep.subr.mxu0 0.0
    %82 = vmatpush1.msra.mxu0 0.0
    %83 = vmatprep.subr.mxu0 0.0
    %84 = vmatpush1.msra.mxu0 0.0
    %85 = vmatprep.subr.mxu0 0.0
    %86 = vmatpush1.msra.mxu0 0.0
    %87 = vmatprep.subr.mxu0 0.0
    %88 = vmatpush1.msra.mxu0 0.0
    %89 = vmatprep.subr.mxu0 0.0
    %90 = vmatpush1.msra.mxu0 0.0
    %91 = vmatprep.subr.mxu0 0.0
    %92 = vmatpush1.msra.mxu0 0.0
    %93 = vmatprep.subr.mxu0 0.0
    %94 = vmatpush1.msra.mxu0 0.0
    %95 = vmatprep.subr.mxu0 0.0
    %96 = vmatpush1.msra.mxu0 0.0
    %97 = vmatprep.subr.mxu0 0.0
    %98 = vmatpush1.msra.mxu0 0.0
    %99 = vmatprep.subr.mxu0 0.0
    %100 = vmatpush1.msra.mxu0 0.0
    %101 = vmatprep.subr.mxu0 0.0
    %102 = vmatpush1.msra.mxu0 0.0
    %103 = vmatprep.subr.mxu0 0.0
    %104 = vmatpush1.msra.mxu0 0.0
    %105 = vmatprep.subr.mxu0 0.0
    %106 = vmatpush1.msra.mxu0 0.0
    %107 = vmatprep.subr.mxu0 0.0
    %108 = vmatpush1.msra.mxu0 0.0
    %109 = vmatprep.subr.mxu0 0.0
    %110 = vmatpush1.msra.mxu0 0.0
    %111 = vmatprep.subr.mxu0 0.0
    %112 = vmatpush1.msra.mxu0 0.0
    %113 = vmatprep.subr.mxu0 0.0
    %114 = vmatpush1.msra.mxu0 0.0
    %115 = vmatprep.subr.mxu0 0.0
    %116 = vmatpush1.msra.mxu0 0.0
    %117 = vmatprep.subr.mxu0 0.0
    %118 = vmatpush1.msra.mxu0 0.0
    %119 = vmatprep.subr.mxu0 0.0
    %120 = vmatpush1.msra.mxu0 0.0
    %121 = vmatprep.subr.mxu0 0.0
    %122 = vmatpush1.msra.mxu0 0.0
    %123 = vmatprep.subr.mxu0 0.0
    %124 = vmatpush1.msra.mxu0 0.0
    %125 = vmatprep.subr.mxu0 0.0
    %126 = vmatpush1.msra.mxu0 0.0
    %127 = vmatprep.mubr.f32.mxu0 0.0
    %128 = vmatmul.mubr.f32.gmra.mrb[0].mxu0 %v61
    %v129 = vpop.f32.mrb[0].mxu0
    %v130 = vadd.f32 %v57, %v129
    %v131 = vpop.f32.mrb[0].mxu0
    %132 = vdwg.mxu0
    %v133 = vmax.f32 %v130, 0.0
    %v134 = vld [vmem:[%s3] sm:$0x1]
    %v135 = vld [vmem:[#allocation2] sm:$0x1]
    %137 = vset.pattern.permute.xlu0 0
    %138 = vperm.xlu0 %137, %v135
    %v139 = vpop.permute.xlu0 %138
    %v141 = vlaneseq
    %v142 = vshrl.u32 %v141, 7
    %v143 = vsub.s32 0, %v142
    %v144 = vrot.slane %v139, %v143
    %vm145 = vcmask 523264
    %v147 = vsel %vm145, %v134, 0
    %v150 = vsel %vm145, %v133, 0
    %152 = vmatprep.subr.mxu0 0.0
    %153 = vmatpush1.xpose.msra.mxu0 %v150
    %154 = vmatprep.subr.mxu0 0.0
    %155 = vmatpush1.xpose.msra.mxu0 0.0
    %156 = vmatprep.subr.mxu0 0.0
    %157 = vmatpush1.xpose.msra.mxu0 0.0
    %158 = vmatprep.subr.mxu0 0.0
    %159 = vmatpush1.xpose.msra.mxu0 0.0
    %160 = vmatprep.subr.mxu0 0.0
    %161 = vmatpush1.xpose.msra.mxu0 0.0
    %162 = vmatprep.subr.mxu0 0.0
    %163 = vmatpush1.xpose.msra.mxu0 0.0
    %164 = vmatprep.subr.mxu0 0.0
    %165 = vmatpush1.xpose.msra.mxu0 0.0
    %166 = vmatprep.subr.mxu0 0.0
    %167 = vmatpush1.xpose.msra.mxu0 0.0
    %168 = vmatprep.subr.mxu0 0.0
    %169 = vmatpush1.xpose.msra.mxu0 0.0
    %170 = vmatprep.subr.mxu0 0.0
    %171 = vmatpush1.xpose.msra.mxu0 0.0
    %172 = vmatprep.subr.mxu0 0.0
    %173 = vmatpush1.xpose.msra.mxu0 0.0
    %174 = vmatprep.subr.mxu0 0.0
    %175 = vmatpush1.xpose.msra.mxu0 0.0
    %176 = vmatprep.subr.mxu0 0.0
    %177 = vmatpush1.xpose.msra.mxu0 0.0
    %178 = vmatprep.subr.mxu0 0.0
    %179 = vmatpush1.xpose.msra.mxu0 0.0
    %180 = vmatprep.subr.mxu0 0.0
    %181 = vmatpush1.xpose.msra.mxu0 0.0
    %182 = vmatprep.subr.mxu0 0.0
    %183 = vmatpush1.xpose.msra.mxu0 0.0
    %184 = vmatprep.subr.mxu0 0.0
    %185 = vmatpush1.xpose.msra.mxu0 0.0
    %186 = vmatprep.subr.mxu0 0.0
    %187 = vmatpush1.xpose.msra.mxu0 0.0
    %188 = vmatprep.subr.mxu0 0.0
    %189 = vmatpush1.xpose.msra.mxu0 0.0
    %190 = vmatprep.subr.mxu0 0.0
    %191 = vmatpush1.xpose.msra.mxu0 0.0
    %192 = vmatprep.subr.mxu0 0.0
    %193 = vmatpush1.xpose.msra.mxu0 0.0
    %194 = vmatprep.subr.mxu0 0.0
    %195 = vmatpush1.xpose.msra.mxu0 0.0
    %196 = vmatprep.subr.mxu0 0.0
    %197 = vmatpush1.xpose.msra.mxu0 0.0
    %198 = vmatprep.subr.mxu0 0.0
    %199 = vmatpush1.xpose.msra.mxu0 0.0
    %200 = vmatprep.subr.mxu0 0.0
    %201 = vmatpush1.xpose.msra.mxu0 0.0
    %202 = vmatprep.subr.mxu0 0.0
    %203 = vmatpush1.xpose.msra.mxu0 0.0
    %204 = vmatprep.subr.mxu0 0.0
    %205 = vmatpush1.xpose.msra.mxu0 0.0
    %206 = vmatprep.subr.mxu0 0.0
    %207 = vmatpush1.xpose.msra.mxu0 0.0
    %208 = vmatprep.subr.mxu0 0.0
    %209 = vmatpush1.xpose.msra.mxu0 0.0
    %210 = vmatprep.subr.mxu0 0.0
    %211 = vmatpush1.xpose.msra.mxu0 0.0
    %212 = vmatprep.subr.mxu0 0.0
    %213 = vmatpush1.xpose.msra.mxu0 0.0
    %214 = vmatprep.subr.mxu0 0.0
    %215 = vmatpush1.xpose.msra.mxu0 0.0
    %216 = vmatprep.mubr.f32.mxu0 0.0
    %217 = vmatmul.mubr.f32.gmra.mrb[0].mxu0 %v147
    %v218 = vpop.f32.mrb[0].mxu0
    %v219 = vadd.f32 %v144, %v218
    %v220 = vpop.f32.mrb[0].mxu0
    %221 = vdwg.mxu0
    %vm222 = vcmask 57344
    %223 = vst.msk [vmem:[#allocation8] sm:$0x1] %vm222, %v219
    // Predicated region
    $region30: #{tpu_custom_call.1} parent=1 // pred_check
      _
    $region31: #{tpu_custom_call.1} parent=1 // pred_check_branch
      %225 = sbr.rel (0) target = $region33
    $region32: #{tpu_custom_call.1} parent=1 // pred_region
      %s227 = ssub.s32 16, 16
      %228 = vsyncadd [#allocation5], %s227
      %s230 = sshll.u32 [#allocation8], 4
      %s231 = int_to_ptr.vmem [resolvable:$true] %s230
      %233 = dma.vmem_to_hbm [thread:$0]  %s231, 16, %s5, [#allocation5]
    $region33: #{tpu_custom_call.1} parent=1 // pred_fallthru
      _
    // Predicated region
    $region34: #{tpu_custom_call.1} parent=1 // pred_check
      _
    $region35: #{tpu_custom_call.1} parent=1 // pred_check_branch
      %235 = sbr.rel (0) target = $region37
    $region36: #{tpu_custom_call.1} parent=1 // pred_region
      %236 = dma.done [#allocation5], 16
    $region37: #{tpu_custom_call.1} parent=1 // pred_fallthru
      _
    %237 = vsyncpa [#allocation4], 1
    %238 = vsyncpa [#allocation7], 1
    %239 = vsyncpa [#allocation5], 1

</llo_original>
